<compile_context>
chip_gen: v5e
topology: v5e:2x2
jax: 0.10.0
libtpu: 0.0.40
codegen_flags: <defaults>
</compile_context>

<pallas_src>
import functools

import jax
import jax.numpy as jnp
from jax import lax
from jax.experimental import pallas as pl
from jax.experimental.pallas import tpu as pltpu


# ----------------------------------------------------------------------------- kernel
def fused_graph_kernel(ids_ref, lap_ref,
                       w_cat_ref, b_lap_ref,
                       w0t_ref, b0_ref, w1t_ref, b1_ref, w2t_ref, b2_ref,
                       out_ref, *, inv_n, vocab):
    """One grid step == TB graphs.

    Per graph g (layer stack == identity, so mean commutes with the linear stage):
       hg[g] = (1/N) * ( counts[g] @ atom_emb  +  lap_sum[g] @ W_lap^T ) + b_lap
             = (1/N) * [counts | lap_sum] @ W_cat + b_lap
       out[g] = MLPReadout(hg[g])   (Linear->ReLU->Linear->ReLU->Linear, L=2)
    """
    tb, n, _ = ids_ref.shape
    ids = ids_ref[...]                                           # (TB, N, 1) int32

    # Bag-of-atom-types counts per graph (exact embedding lookup, summed over nodes).
    one_hot = (ids == lax.broadcasted_iota(jnp.int32, (tb, n, vocab), 2))
    counts = jnp.sum(one_hot.astype(jnp.float32), axis=1)        # (TB, Vp)
    lap_sum = jnp.sum(lap_ref[...], axis=1)                      # (TB, P)

    feats = jnp.concatenate([counts, lap_sum], axis=-1)          # (TB, K)

    # Fused embedding + lap-linear stage: one bf16 MXU contraction, f32 accumulate.
    hg = jnp.dot(feats.astype(jnp.bfloat16), w_cat_ref[...],
                 preferred_element_type=jnp.float32)             # (TB, H)
    hg = hg * inv_n + b_lap_ref[...]                             # mean_nodes + bias

    # TODO(synk): GraphTransformerLayer stack (definition not provided) would act
    #             on per-node h here; treated as identity (which is what permits
    #             the mean-before-matmul reduction above).

    # MLPReadout, batched over the TB graphs (f32; tiny matmuls).
    y = jnp.maximum(
        jnp.dot(hg, w0t_ref[...], preferred_element_type=jnp.float32) + b0_ref[...],
        0.0)
    y = jnp.maximum(
        jnp.dot(y, w1t_ref[...], preferred_element_type=jnp.float32) + b1_ref[...],
        0.0)
    y = jnp.dot(y, w2t_ref[...], preferred_element_type=jnp.float32) + b2_ref[...]

    out_ref[0] = y.T                                             # (1, TB) lane-dense


# ----------------------------------------------------------------------------- wrapper
def _weight_spec(w):
    nd = w.ndim
    return pl.BlockSpec(w.shape, lambda b, nd=nd: (0,) * nd)


@functools.partial(jax.jit, static_argnames=("tb",))
def graph_transformer_forward(params, h_ids, h_lap_pos_enc, e_ids, tb=None):
    # e_ids intentionally unused: edge embedding only feeds the missing layer stack.
    del e_ids
    B, N = h_ids.shape
    P = h_lap_pos_enc.shape[-1]
    H = params["atom_emb"].shape[1]
    V = params["atom_emb"].shape[0]

    # ---- graphs-per-block choice: big blocks for MXU fill / overhead amortization,
    #      but keep >= 2 grid steps when possible (v7x has 2 TensorCores).
    if tb is None:
        tb = min(B, 256)
        if B >= 2 and pl.cdiv(B, tb) < 2:
            tb = pl.cdiv(B, 2)
    nb = pl.cdiv(B, tb)
    Bp = nb * tb

    # ---- fused weight W_cat = [atom_emb ; W_lap^T], contraction dim padded to 8.
    K = ((V + P + 7) // 8) * 8
    Vp = K - P                                   # padded vocab (zero rows never hit)
    w_cat = jnp.concatenate(
        [jnp.pad(params["atom_emb"], ((0, Vp - V), (0, 0))), params["w_lap_t"]],
        axis=0).astype(jnp.bfloat16)             # (K, H)

    # ---- batched inputs, padded to a whole number of blocks.
    ids = jnp.pad(h_ids.astype(jnp.int32), ((0, Bp - B), (0, 0))).reshape(Bp, N, 1)
    lap = jnp.pad(h_lap_pos_enc.astype(jnp.float32), ((0, Bp - B), (0, 0), (0, 0)))

    weights = (w_cat, params["b_lap"],
               params["w0_t"], params["b0"],
               params["w1_t"], params["b1"],
               params["w2_t"], params["b2"])

    kernel = functools.partial(fused_graph_kernel, inv_n=1.0 / N, vocab=Vp)

    out = pl.pallas_call(
        kernel,
        out_shape=jax.ShapeDtypeStruct((nb, 1, tb), jnp.float32),
        grid=(nb,),
        in_specs=[pl.BlockSpec((tb, N, 1), lambda b: (b, 0, 0)),
                  pl.BlockSpec((tb, N, P), lambda b: (b, 0, 0))]
                 + [_weight_spec(w) for w in weights],
        out_specs=pl.BlockSpec((1, 1, tb), lambda b: (b, 0, 0)),
        compiler_params=pltpu.CompilerParams(
            dimension_semantics=("parallel",)),   # steps shard across TCs (v7x)
    )(ids, lap, *weights)

    return out.reshape(Bp, 1)[:B]


# ----------------------------------------------------------------------------- reference
def reference_forward(params, h_ids, h_lap_pos_enc, e_ids):
    """Pure-JAX f32 reference of the same (embedding + mean readout + MLP) path."""
    del e_ids
    h = params["atom_emb"][h_ids]                                     # (B, N, H)
    h = h + h_lap_pos_enc.astype(jnp.float32) @ params["w_lap_t"] + params["b_lap"]
    hg = h.mean(axis=1)                                               # (B, H)
    y = jnp.maximum(hg @ params["w0_t"] + params["b0"], 0.0)
    y = jnp.maximum(y @ params["w1_t"] + params["b1"], 0.0)
    return y @ params["w2_t"] + params["b2"]                          # (B, 1)


# ----------------------------------------------------------------------------- params
def init_params(key, num_atom_type=28, num_bond_type=4, hidden_dim=32, out_dim=32,
                pos_enc_dim=8):
    ks = jax.random.split(key, 10)
    s = 0.1
    p = {
        # embedding_h : nn.Embedding(num_atom_type, hidden_dim)
        "atom_emb": s * jax.random.normal(ks[0], (num_atom_type, hidden_dim), jnp.float32),
        # embedding_e : nn.Embedding(num_bond_type, hidden_dim)
        # TODO(synk): unused until the GraphTransformerLayer stack is implemented.
        "bond_emb": s * jax.random.normal(ks[1], (num_bond_type, hidden_dim), jnp.float32),
        # embedding_lap_pos_enc : nn.Linear(pos_enc_dim, hidden_dim) -> stored transposed
        "w_lap_t": s * jax.random.normal(ks[2], (pos_enc_dim, hidden_dim), jnp.float32),
        "b_lap": s * jax.random.normal(ks[3], (1, hidden_dim), jnp.float32),
        # MLPReadout(out_dim, 1, L=2): 32 -> 16 -> 8 -> 1   (weights stored transposed)
        "w0_t": s * jax.random.normal(ks[4], (out_dim, out_dim // 2), jnp.float32),
        "b0": s * jax.random.normal(ks[5], (1, out_dim // 2), jnp.float32),
        "w1_t": s * jax.random.normal(ks[6], (out_dim // 2, out_dim // 4), jnp.float32),
        "b1": s * jax.random.normal(ks[7], (1, out_dim // 4), jnp.float32),
        "w2_t": s * jax.random.normal(ks[8], (out_dim // 4, 1), jnp.float32),
        "b2": s * jax.random.normal(ks[9], (1, 1), jnp.float32),
    }
    return p


# ----------------------------------------------------------------------------- main
if __name__ == "__main__":
    key = jax.random.PRNGKey(0)
    k_par, k_ids, k_lap, k_eids = jax.random.split(key, 4)

    B, N, P = 2, 8, 8          # 2 graphs, 8 nodes each, lap pos-enc dim 8
    E = 24                     # total edges in the batched graph

    params = init_params(k_par)

    h_ids = jax.random.randint(k_ids, (B, N), 0, 28, dtype=jnp.int32)      # atom types
    h_lap = jax.random.normal(k_lap, (B, N, P), jnp.float32)               # lap pos enc
    e_ids = jax.random.randint(k_eids, (E,), 0, 4, dtype=jnp.int32)        # bond types

    out = graph_transformer_forward(params, h_ids, h_lap, e_ids)
    out = jax.block_until_ready(out)

    ref = reference_forward(params, h_ids, h_lap, e_ids)
    assert out.shape == (B, 1) and out.dtype == jnp.float32
    # bf16 operands are only used on the fused embedding matmul (f32 accumulate);
    # end-to-end error is << 1e-3 for these scales.
    assert jnp.allclose(out, ref, rtol=1e-3, atol=1e-3), (out, ref)
    print("KERNEL_OK")
</pallas_src>

<mosaic_0001>
module attributes {stable_mosaic.version = 11 : i64} {
  func.func @fused_graph_kernel(%arg0: i32, %arg1: memref<1x8x1xi32, #tpu.memory_space<vmem>>, %arg2: memref<1x8x8xf32, #tpu.memory_space<vmem>>, %arg3: memref<40x32xbf16, #tpu.memory_space<vmem>>, %arg4: memref<1x32xf32, #tpu.memory_space<vmem>>, %arg5: memref<32x16xf32, #tpu.memory_space<vmem>>, %arg6: memref<1x16xf32, #tpu.memory_space<vmem>>, %arg7: memref<16x8xf32, #tpu.memory_space<vmem>>, %arg8: memref<1x8xf32, #tpu.memory_space<vmem>>, %arg9: memref<8x1xf32, #tpu.memory_space<vmem>>, %arg10: memref<1x1xf32, #tpu.memory_space<vmem>>, %arg11: memref<1x1x1xf32, #tpu.memory_space<vmem>>) attributes {dimension_semantics = [#tpu.dimension_semantics<parallel>], iteration_bounds = array<i64: 2>, scalar_prefetch = 0 : i64, scratch_operands = 0 : i64, tpu.core_type = #tpu.core_type<tc>, window_params = [{transform_indices = @transform_0, window_bounds = array<i64: 1, 8, 1>}, {transform_indices = @transform_1, window_bounds = array<i64: 1, 8, 8>}, {pipeline_mode = #tpu.pipeline_mode<synchronous>, transform_indices = @transform_2, window_bounds = array<i64: 40, 32>}, {pipeline_mode = #tpu.pipeline_mode<synchronous>, transform_indices = @transform_3, window_bounds = array<i64: 1, 32>}, {pipeline_mode = #tpu.pipeline_mode<synchronous>, transform_indices = @transform_4, window_bounds = array<i64: 32, 16>}, {pipeline_mode = #tpu.pipeline_mode<synchronous>, transform_indices = @transform_5, window_bounds = array<i64: 1, 16>}, {pipeline_mode = #tpu.pipeline_mode<synchronous>, transform_indices = @transform_6, window_bounds = array<i64: 16, 8>}, {pipeline_mode = #tpu.pipeline_mode<synchronous>, transform_indices = @transform_7, window_bounds = array<i64: 1, 8>}, {pipeline_mode = #tpu.pipeline_mode<synchronous>, transform_indices = @transform_8, window_bounds = array<i64: 8, 1>}, {pipeline_mode = #tpu.pipeline_mode<synchronous>, transform_indices = @transform_9, window_bounds = array<i64: 1, 1>}, {transform_indices = @transform_10, window_bounds = array<i64: 1, 1, 1>}]} {
    %c0 = arith.constant 0 : index
    %c0_0 = arith.constant 0 : index
    %c0_1 = arith.constant 0 : index
    %0 = vector.load %arg1[%c0, %c0_0, %c0_1] : memref<1x8x1xi32, #tpu.memory_space<vmem>>, vector<1x8x1xi32>
    %1 = tpu.iota {dimensions = array<i32: 2>} : vector<1x8x32xi32>
    %2 = vector.broadcast %0 : vector<1x8x1xi32> to vector<1x8x32xi32>
    %3 = arith.cmpi eq, %2, %1 : vector<1x8x32xi32>
    %4 = arith.extui %3 : vector<1x8x32xi1> to vector<1x8x32xi32>
    %5 = arith.sitofp %4 : vector<1x8x32xi32> to vector<1x8x32xf32>
    %cst = arith.constant dense<0.000000e+00> : vector<1x32xf32>
    %6 = vector.multi_reduction <add>, %5, %cst [1] : vector<1x8x32xf32> to vector<1x32xf32>
    %c0_2 = arith.constant 0 : index
    %c0_3 = arith.constant 0 : index
    %c0_4 = arith.constant 0 : index
    %7 = vector.load %arg2[%c0_2, %c0_3, %c0_4] : memref<1x8x8xf32, #tpu.memory_space<vmem>>, vector<1x8x8xf32>
    %cst_5 = arith.constant dense<0.000000e+00> : vector<1x8xf32>
    %8 = vector.multi_reduction <add>, %7, %cst_5 [1] : vector<1x8x8xf32> to vector<1x8xf32>
    %9 = tpu.concatenate %6, %8 in 1 : vector<1x32xf32>, vector<1x8xf32> -> vector<1x40xf32>
    %10 = arith.truncf %9 : vector<1x40xf32> to vector<1x40xbf16>
    %c0_6 = arith.constant 0 : index
    %c0_7 = arith.constant 0 : index
    %11 = vector.load %arg3[%c0_6, %c0_7] : memref<40x32xbf16, #tpu.memory_space<vmem>>, vector<40x32xbf16>
    %cst_8 = arith.constant dense<0.000000e+00> : vector<1x32xf32>
    %12 = tpu.matmul %10, %11, %cst_8 {dimension_numbers = #tpu.dot_dimension_numbers<[1], [0], [0], [1], [0, 0, 1, 1], [], []>} : vector<1x40xbf16>, vector<40x32xbf16>, vector<1x32xf32> -> vector<1x32xf32>
    %cst_9 = arith.constant 1.250000e-01 : f32
    %13 = vector.broadcast %cst_9 : f32 to vector<1x32xf32>
    %14 = arith.mulf %12, %13 : vector<1x32xf32>
    %c0_10 = arith.constant 0 : index
    %c0_11 = arith.constant 0 : index
    %15 = vector.load %arg4[%c0_10, %c0_11] : memref<1x32xf32, #tpu.memory_space<vmem>>, vector<1x32xf32>
    %16 = arith.addf %14, %15 : vector<1x32xf32>
    %c0_12 = arith.constant 0 : index
    %c0_13 = arith.constant 0 : index
    %17 = vector.load %arg5[%c0_12, %c0_13] : memref<32x16xf32, #tpu.memory_space<vmem>>, vector<32x16xf32>
    %cst_14 = arith.constant dense<0.000000e+00> : vector<1x16xf32>
    %18 = tpu.matmul %16, %17, %cst_14 {dimension_numbers = #tpu.dot_dimension_numbers<[1], [0], [0], [1], [0, 0, 1, 1], [], []>} : vector<1x32xf32>, vector<32x16xf32>, vector<1x16xf32> -> vector<1x16xf32>
    %c0_15 = arith.constant 0 : index
    %c0_16 = arith.constant 0 : index
    %19 = vector.load %arg6[%c0_15, %c0_16] : memref<1x16xf32, #tpu.memory_space<vmem>>, vector<1x16xf32>
    %20 = arith.addf %18, %19 : vector<1x16xf32>
    %cst_17 = arith.constant 0.000000e+00 : f32
    %21 = vector.broadcast %cst_17 : f32 to vector<1x16xf32>
    %22 = arith.maximumf %20, %21 : vector<1x16xf32>
    %c0_18 = arith.constant 0 : index
    %c0_19 = arith.constant 0 : index
    %23 = vector.load %arg7[%c0_18, %c0_19] : memref<16x8xf32, #tpu.memory_space<vmem>>, vector<16x8xf32>
    %cst_20 = arith.constant dense<0.000000e+00> : vector<1x8xf32>
    %24 = tpu.matmul %22, %23, %cst_20 {dimension_numbers = #tpu.dot_dimension_numbers<[1], [0], [0], [1], [0, 0, 1, 1], [], []>} : vector<1x16xf32>, vector<16x8xf32>, vector<1x8xf32> -> vector<1x8xf32>
    %c0_21 = arith.constant 0 : index
    %c0_22 = arith.constant 0 : index
    %25 = vector.load %arg8[%c0_21, %c0_22] : memref<1x8xf32, #tpu.memory_space<vmem>>, vector<1x8xf32>
    %26 = arith.addf %24, %25 : vector<1x8xf32>
    %cst_23 = arith.constant 0.000000e+00 : f32
    %27 = vector.broadcast %cst_23 : f32 to vector<1x8xf32>
    %28 = arith.maximumf %26, %27 : vector<1x8xf32>
    %c0_24 = arith.constant 0 : index
    %c0_25 = arith.constant 0 : index
    %29 = vector.load %arg9[%c0_24, %c0_25] : memref<8x1xf32, #tpu.memory_space<vmem>>, vector<8x1xf32>
    %cst_26 = arith.constant dense<0.000000e+00> : vector<1x1xf32>
    %30 = tpu.matmul %28, %29, %cst_26 {dimension_numbers = #tpu.dot_dimension_numbers<[1], [0], [0], [1], [0, 0, 1, 1], [], []>} : vector<1x8xf32>, vector<8x1xf32>, vector<1x1xf32> -> vector<1x1xf32>
    %c0_27 = arith.constant 0 : index
    %c0_28 = arith.constant 0 : index
    %31 = vector.load %arg10[%c0_27, %c0_28] : memref<1x1xf32, #tpu.memory_space<vmem>>, vector<1x1xf32>
    %32 = arith.addf %30, %31 : vector<1x1xf32>
    %33 = tpu.transpose %32, [1, 0] : vector<1x1xf32> -> vector<1x1xf32>
    %c0_29 = arith.constant 0 : index
    %c0_30 = arith.constant 0 : index
    %c0_31 = arith.constant 0 : index
    %34 = vector.load %arg11[%c0_29, %c0_30, %c0_31] : memref<1x1x1xf32, #tpu.memory_space<vmem>>, vector<1x1x1xf32>
    %35 = vector.shape_cast %34 : vector<1x1x1xf32> to vector<1x1xf32>
    %36 = vector.shape_cast %33 : vector<1x1xf32> to vector<1x1x1xf32>
    tpu.vector_store %arg11[%c0_29, %c0_30, %c0_31], %36 {strides = array<i32>} : memref<1x1x1xf32, #tpu.memory_space<vmem>>, vector<1x1x1xf32>,
    return
  }
  func.func @transform_0(%arg0: i32) -> (i32, i32, i32) {
    %c0_i32 = arith.constant 0 : i32
    %c0_i32_0 = arith.constant 0 : i32
    %c0_i32_1 = arith.constant 0 : i32
    return %arg0, %c0_i32, %c0_i32_0 : i32, i32, i32
  }
  func.func @transform_1(%arg0: i32) -> (i32, i32, i32) {
    %c0_i32 = arith.constant 0 : i32
    %c0_i32_0 = arith.constant 0 : i32
    %c0_i32_1 = arith.constant 0 : i32
    return %arg0, %c0_i32, %c0_i32_0 : i32, i32, i32
  }
  func.func @transform_2(%arg0: i32) -> (i32, i32) {
    %c0_i32 = arith.constant 0 : i32
    %c0_i32_0 = arith.constant 0 : i32
    %c0_i32_1 = arith.constant 0 : i32
    return %c0_i32, %c0_i32_0 : i32, i32
  }
  func.func @transform_3(%arg0: i32) -> (i32, i32) {
    %c0_i32 = arith.constant 0 : i32
    %c0_i32_0 = arith.constant 0 : i32
    %c0_i32_1 = arith.constant 0 : i32
    return %c0_i32, %c0_i32_0 : i32, i32
  }
  func.func @transform_4(%arg0: i32) -> (i32, i32) {
    %c0_i32 = arith.constant 0 : i32
    %c0_i32_0 = arith.constant 0 : i32
    %c0_i32_1 = arith.constant 0 : i32
    return %c0_i32, %c0_i32_0 : i32, i32
  }
  func.func @transform_5(%arg0: i32) -> (i32, i32) {
    %c0_i32 = arith.constant 0 : i32
    %c0_i32_0 = arith.constant 0 : i32
    %c0_i32_1 = arith.constant 0 : i32
    return %c0_i32, %c0_i32_0 : i32, i32
  }
  func.func @transform_6(%arg0: i32) -> (i32, i32) {
    %c0_i32 = arith.constant 0 : i32
    %c0_i32_0 = arith.constant 0 : i32
    %c0_i32_1 = arith.constant 0 : i32
    return %c0_i32, %c0_i32_0 : i32, i32
  }
  func.func @transform_7(%arg0: i32) -> (i32, i32) {
    %c0_i32 = arith.constant 0 : i32
    %c0_i32_0 = arith.constant 0 : i32
    %c0_i32_1 = arith.constant 0 : i32
    return %c0_i32, %c0_i32_0 : i32, i32
  }
  func.func @transform_8(%arg0: i32) -> (i32, i32) {
    %c0_i32 = arith.constant 0 : i32
    %c0_i32_0 = arith.constant 0 : i32
    %c0_i32_1 = arith.constant 0 : i32
    return %c0_i32, %c0_i32_0 : i32, i32
  }
  func.func @transform_9(%arg0: i32) -> (i32, i32) {
    %c0_i32 = arith.constant 0 : i32
    %c0_i32_0 = arith.constant 0 : i32
    %c0_i32_1 = arith.constant 0 : i32
    return %c0_i32, %c0_i32_0 : i32, i32
  }
  func.func @transform_10(%arg0: i32) -> (i32, i32, i32) {
    %c0_i32 = arith.constant 0 : i32
    %c0_i32_0 = arith.constant 0 : i32
    %c0_i32_1 = arith.constant 0 : i32
    return %arg0, %c0_i32, %c0_i32_0 : i32, i32, i32
  }
}

</mosaic_0001>

<llo_original>
// kernel: graph_transformer_forward.1
$region0: #{graph_transformer_forward.1}
  #allocation0 [shape = 'u32[]', space=smem, size = 0x4, offset = 0x4, fixed_abs, tag = 'smem constant byte address 0x4 - core index']
  #allocation1 [shape = 'u32[72,128]{1,0:T(1,128)}', space=vmem, size = 0x9000, scoped, tag = 'internal scratch']
  #allocation2 [shape = 'f32[1,1]{1,0:T(1,128)S(1)}', space=vmem, size = 0x200, scoped, tag = 'scoped memory for graph_transformer_forward.1']
  %s0 = inlined_call_operand.vmem [shape: s32[2,8,1], index: 0, kind: input, shape index: {}]
  %s1 = inlined_call_operand.vmem [shape: f32[2,8,8], index: 1, kind: input, shape index: {}]
  %s2 = inlined_call_operand.vmem [shape: bf16[40,32], index: 2, kind: input, shape index: {}]
  %s3 = inlined_call_operand.vmem [shape: f32[1,32], index: 3, kind: input, shape index: {}]
  %s4 = inlined_call_operand.vmem [shape: f32[32,16], index: 4, kind: input, shape index: {}]
  %s5 = inlined_call_operand.vmem [shape: f32[1,16], index: 5, kind: input, shape index: {}]
  %s6 = inlined_call_operand.vmem [shape: f32[16,8], index: 6, kind: input, shape index: {}]
  %s7 = inlined_call_operand.vmem [shape: f32[1,8], index: 7, kind: input, shape index: {}]
  %s8 = inlined_call_operand.vmem [shape: f32[8,1], index: 8, kind: input, shape index: {}]
  %s9 = inlined_call_operand.<no memory space> [shape: f32[1,1], index: 9, kind: input, shape index: {}]
  %s10 = inlined_call_operand.vmem [shape: f32[2,1,1], index: 10, kind: output, shape index: {}]
  %s11 = sld [smem:[#allocation0]]
  $region73: #{graph_transformer_forward.1} parent=0
    _
  %s13 = ssub.s32 1, %s11
  %s14 = scalar_select 0, %s13, %s11
  %v15 = vstv %s9
  %16 = vst [vmem:[#allocation2] sm:$0x1] %v15
  loop: start=0, step=1, limit=4
  $region2: #{graph_transformer_forward.1} parent=0 // loop_pre_header
    _
  $region3: #{graph_transformer_forward.1} parent=0 // loop_header
    %s18 = sphi 0, %s22
    %p19 = scmp.ge.s32.totalorder %s18, 4
    %s28 = sphi 0, %s30
    %s31 = sphi 0, %s28
    %s32 = sphi 0, %s31
    %s48 = sphi 0, %s32
    %s54 = sphi 0, %s56
    %s57 = sphi 0, %s54
    %s58 = sphi 0, %s57
    %s74 = sphi 0, %s58
    %s78 = sphi 0, %s78
    %s80 = sphi 0, %s78
    %s81 = sphi 0, %s80
    %s95 = sphi 0, %s81
    %s99 = sphi 0, %s99
    %s101 = sphi 0, %s99
    %s102 = sphi 0, %s101
    %s116 = sphi 0, %s102
    %s120 = sphi 0, %s120
    %s122 = sphi 0, %s120
    %s123 = sphi 0, %s122
    %s137 = sphi 0, %s123
    %s141 = sphi 0, %s141
    %s143 = sphi 0, %s141
    %s144 = sphi 0, %s143
    %s158 = sphi 0, %s144
    %s162 = sphi 0, %s162
    %s164 = sphi 0, %s162
    %s165 = sphi 0, %s164
    %s179 = sphi 0, %s165
    %s183 = sphi 0, %s183
    %s185 = sphi 0, %s183
    %s186 = sphi 0, %s185
    %s200 = sphi 0, %s186
    %s204 = sphi 0, %s204
    %s206 = sphi 0, %s204
    %s207 = sphi 0, %s206
    %s221 = sphi 0, %s207
    %s225 = sphi 0, %s225
    %s227 = sphi 0, %s225
    %s228 = sphi 0, %s227
    %s242 = sphi 0, %s228
    %s248 = sphi 0, %s250
    %s251 = sphi 0, %s248
    %s252 = sphi 0, %s251
    %s268 = sphi 0, %s252
  $region4: #{graph_transformer_forward.1} parent=0 // loop_header_branch
    %21 = sbr.rel (%p19) target = $region8
  $region5: #{graph_transformer_forward.1} parent=0 // loop_body
    %s23 = ssub.s32 %s18, 1
    %s24 = ssub.s32 %s18, 2
    %s25 = sadd.s32 %s18, 1
    %s26 = ssub.s32 %s18, %s25
    %p27 = scmp.eq.s32.totalorder %s26, 0
    %s29 = sadd.s32 %s28, 1
    %s30 = scalar_select %p27, %s28, %s29
    %p33 = pneg %p27
    %p34 = scmp.eq.s32.totalorder %s18, 1
    %p35 = por %p33, %p34
    %p36 = scmp.ne.s32.totalorder %s28, %s31
    %p37 = scmp.eq.s32.totalorder %s18, 0
    %p38 = por %p36, %p37
    %p39 = scmp.ne.s32.totalorder %s28, %s31
    %p40 = scmp.eq.s32.totalorder %s23, 1
    %p41 = por %p39, %p40
    %p42 = scmp.ne.s32.totalorder %s31, %s32
    %p43 = scmp.eq.s32.totalorder %s23, 0
    %p44 = por %p42, %p43
    %p45 = scmp.ne.s32.totalorder %s31, %s32
    %p46 = scmp.eq.s32.totalorder %s24, 1
    %p47 = por %p45, %p46
    %p49 = scmp.ne.s32.totalorder %s32, %s48
    %p50 = scmp.eq.s32.totalorder %s24, 0
    %p51 = por %p49, %p50
    %s52 = ssub.s32 %s18, %s25
    %p53 = scmp.eq.s32.totalorder %s52, 0
    %s55 = sadd.s32 %s54, 1
    %s56 = scalar_select %p53, %s54, %s55
    %p59 = pneg %p53
    %p60 = scmp.eq.s32.totalorder %s18, 1
    %p61 = por %p59, %p60
    %p62 = scmp.ne.s32.totalorder %s54, %s57
    %p63 = scmp.eq.s32.totalorder %s18, 0
    %p64 = por %p62, %p63
    %p65 = scmp.ne.s32.totalorder %s54, %s57
    %p66 = scmp.eq.s32.totalorder %s23, 1
    %p67 = por %p65, %p66
    %p68 = scmp.ne.s32.totalorder %s57, %s58
    %p69 = scmp.eq.s32.totalorder %s23, 0
    %p70 = por %p68, %p69
    %p71 = scmp.ne.s32.totalorder %s57, %s58
    %p72 = scmp.eq.s32.totalorder %s24, 1
    %p73 = por %p71, %p72
    %p75 = scmp.ne.s32.totalorder %s58, %s74
    %p76 = scmp.eq.s32.totalorder %s24, 0
    %p77 = por %p75, %p76
    %s79 = sadd.s32 %s78, 1
    %p82 = scmp.eq.s32.totalorder %s18, 1
    %p83 = scmp.ne.s32.totalorder %s78, %s80
    %p84 = scmp.eq.s32.totalorder %s18, 0
    %p85 = por %p83, %p84
    %p86 = scmp.ne.s32.totalorder %s78, %s80
    %p87 = scmp.eq.s32.totalorder %s23, 1
    %p88 = por %p86, %p87
    %p89 = scmp.ne.s32.totalorder %s80, %s81
    %p90 = scmp.eq.s32.totalorder %s23, 0
    %p91 = por %p89, %p90
    %p92 = scmp.ne.s32.totalorder %s80, %s81
    %p93 = scmp.eq.s32.totalorder %s24, 1
    %p94 = por %p92, %p93
    %p96 = scmp.ne.s32.totalorder %s81, %s95
    %p97 = scmp.eq.s32.totalorder %s24, 0
    %p98 = por %p96, %p97
    %s100 = sadd.s32 %s99, 1
    %p103 = scmp.eq.s32.totalorder %s18, 1
    %p104 = scmp.ne.s32.totalorder %s99, %s101
    %p105 = scmp.eq.s32.totalorder %s18, 0
    %p106 = por %p104, %p105
    %p107 = scmp.ne.s32.totalorder %s99, %s101
    %p108 = scmp.eq.s32.totalorder %s23, 1
    %p109 = por %p107, %p108
    %p110 = scmp.ne.s32.totalorder %s101, %s102
    %p111 = scmp.eq.s32.totalorder %s23, 0
    %p112 = por %p110, %p111
    %p113 = scmp.ne.s32.totalorder %s101, %s102
    %p114 = scmp.eq.s32.totalorder %s24, 1
    %p115 = por %p113, %p114
    %p117 = scmp.ne.s32.totalorder %s102, %s116
    %p118 = scmp.eq.s32.totalorder %s24, 0
    %p119 = por %p117, %p118
    %s121 = sadd.s32 %s120, 1
    %p124 = scmp.eq.s32.totalorder %s18, 1
    %p125 = scmp.ne.s32.totalorder %s120, %s122
    %p126 = scmp.eq.s32.totalorder %s18, 0
    %p127 = por %p125, %p126
    %p128 = scmp.ne.s32.totalorder %s120, %s122
    %p129 = scmp.eq.s32.totalorder %s23, 1
    %p130 = por %p128, %p129
    %p131 = scmp.ne.s32.totalorder %s122, %s123
    %p132 = scmp.eq.s32.totalorder %s23, 0
    %p133 = por %p131, %p132
    %p134 = scmp.ne.s32.totalorder %s122, %s123
    %p135 = scmp.eq.s32.totalorder %s24, 1
    %p136 = por %p134, %p135
    %p138 = scmp.ne.s32.totalorder %s123, %s137
    %p139 = scmp.eq.s32.totalorder %s24, 0
    %p140 = por %p138, %p139
    %s142 = sadd.s32 %s141, 1
    %p145 = scmp.eq.s32.totalorder %s18, 1
    %p146 = scmp.ne.s32.totalorder %s141, %s143
    %p147 = scmp.eq.s32.totalorder %s18, 0
    %p148 = por %p146, %p147
    %p149 = scmp.ne.s32.totalorder %s141, %s143
    %p150 = scmp.eq.s32.totalorder %s23, 1
    %p151 = por %p149, %p150
    %p152 = scmp.ne.s32.totalorder %s143, %s144
    %p153 = scmp.eq.s32.totalorder %s23, 0
    %p154 = por %p152, %p153
    %p155 = scmp.ne.s32.totalorder %s143, %s144
    %p156 = scmp.eq.s32.totalorder %s24, 1
    %p157 = por %p155, %p156
    %p159 = scmp.ne.s32.totalorder %s144, %s158
    %p160 = scmp.eq.s32.totalorder %s24, 0
    %p161 = por %p159, %p160
    %s163 = sadd.s32 %s162, 1
    %p166 = scmp.eq.s32.totalorder %s18, 1
    %p167 = scmp.ne.s32.totalorder %s162, %s164
    %p168 = scmp.eq.s32.totalorder %s18, 0
    %p169 = por %p167, %p168
    %p170 = scmp.ne.s32.totalorder %s162, %s164
    %p171 = scmp.eq.s32.totalorder %s23, 1
    %p172 = por %p170, %p171
    %p173 = scmp.ne.s32.totalorder %s164, %s165
    %p174 = scmp.eq.s32.totalorder %s23, 0
    %p175 = por %p173, %p174
    %p176 = scmp.ne.s32.totalorder %s164, %s165
    %p177 = scmp.eq.s32.totalorder %s24, 1
    %p178 = por %p176, %p177
    %p180 = scmp.ne.s32.totalorder %s165, %s179
    %p181 = scmp.eq.s32.totalorder %s24, 0
    %p182 = por %p180, %p181
    %s184 = sadd.s32 %s183, 1
    %p187 = scmp.eq.s32.totalorder %s18, 1
    %p188 = scmp.ne.s32.totalorder %s183, %s185
    %p189 = scmp.eq.s32.totalorder %s18, 0
    %p190 = por %p188, %p189
    %p191 = scmp.ne.s32.totalorder %s183, %s185
    %p192 = scmp.eq.s32.totalorder %s23, 1
    %p193 = por %p191, %p192
    %p194 = scmp.ne.s32.totalorder %s185, %s186
    %p195 = scmp.eq.s32.totalorder %s23, 0
    %p196 = por %p194, %p195
    %p197 = scmp.ne.s32.totalorder %s185, %s186
    %p198 = scmp.eq.s32.totalorder %s24, 1
    %p199 = por %p197, %p198
    %p201 = scmp.ne.s32.totalorder %s186, %s200
    %p202 = scmp.eq.s32.totalorder %s24, 0
    %p203 = por %p201, %p202
    %s205 = sadd.s32 %s204, 1
    %p208 = scmp.eq.s32.totalorder %s18, 1
    %p209 = scmp.ne.s32.totalorder %s204, %s206
    %p210 = scmp.eq.s32.totalorder %s18, 0
    %p211 = por %p209, %p210
    %p212 = scmp.ne.s32.totalorder %s204, %s206
    %p213 = scmp.eq.s32.totalorder %s23, 1
    %p214 = por %p212, %p213
    %p215 = scmp.ne.s32.totalorder %s206, %s207
    %p216 = scmp.eq.s32.totalorder %s23, 0
    %p217 = por %p215, %p216
    %p218 = scmp.ne.s32.totalorder %s206, %s207
    %p219 = scmp.eq.s32.totalorder %s24, 1
    %p220 = por %p218, %p219
    %p222 = scmp.ne.s32.totalorder %s207, %s221
    %p223 = scmp.eq.s32.totalorder %s24, 0
    %p224 = por %p222, %p223
    %s226 = sadd.s32 %s225, 1
    %p229 = scmp.eq.s32.totalorder %s18, 1
    %p230 = scmp.ne.s32.totalorder %s225, %s227
    %p231 = scmp.eq.s32.totalorder %s18, 0
    %p232 = por %p230, %p231
    %p233 = scmp.ne.s32.totalorder %s225, %s227
    %p234 = scmp.eq.s32.totalorder %s23, 1
    %p235 = por %p233, %p234
    %p236 = scmp.ne.s32.totalorder %s227, %s228
    %p237 = scmp.eq.s32.totalorder %s23, 0
    %p238 = por %p236, %p237
    %p239 = scmp.ne.s32.totalorder %s227, %s228
    %p240 = scmp.eq.s32.totalorder %s24, 1
    %p241 = por %p239, %p240
    %p243 = scmp.ne.s32.totalorder %s228, %s242
    %p244 = scmp.eq.s32.totalorder %s24, 0
    %p245 = por %p243, %p244
    %s246 = ssub.s32 %s18, %s25
    %p247 = scmp.eq.s32.totalorder %s246, 0
    %s249 = sadd.s32 %s248, 1
    %s250 = scalar_select %p247, %s248, %s249
    %p253 = pneg %p247
    %p254 = scmp.eq.s32.totalorder %s18, 1
    %p255 = por %p253, %p254
    %p256 = scmp.ne.s32.totalorder %s248, %s251
    %p257 = scmp.eq.s32.totalorder %s18, 0
    %p258 = por %p256, %p257
    %p259 = scmp.ne.s32.totalorder %s248, %s251
    %p260 = scmp.eq.s32.totalorder %s23, 1
    %p261 = por %p259, %p260
    %p262 = scmp.ne.s32.totalorder %s251, %s252
    %p263 = scmp.eq.s32.totalorder %s23, 0
    %p264 = por %p262, %p263
    %p265 = scmp.ne.s32.totalorder %s251, %s252
    %p266 = scmp.eq.s32.totalorder %s24, 1
    %p267 = por %p265, %p266
    %p269 = scmp.ne.s32.totalorder %s252, %s268
    %p270 = scmp.eq.s32.totalorder %s24, 0
    %p271 = por %p269, %p270
    %p272 = scmp.le.s32.totalorder 1, %s18
    %p273 = scmp.lt.s32.totalorder %s18, 3
    %p274 = pnand %p272, %p273
    %p275 = pneg %p274
    // Predicated region
    $region9: #{graph_transformer_forward.1} parent=5 // pred_check
      _
    $region10: #{graph_transformer_forward.1} parent=5 // pred_check_branch
      %277 = sbr.rel (%p274) target = $region12
    $region11: #{graph_transformer_forward.1} parent=5 // pred_region
      %s278 = ssub.s32 %s18, 1
      // Predicated region
      $region13: #{graph_transformer_forward.1} parent=11 // pred_check
        %p279 = pneg %p91
      $region14: #{graph_transformer_forward.1} parent=11 // pred_check_branch
        %281 = sbr.rel (%p279) target = $region16
      $region15: #{graph_transformer_forward.1} parent=11 // pred_region
        _
      $region16: #{graph_transformer_forward.1} parent=11 // pred_fallthru
        _
      // Predicated region
      $region17: #{graph_transformer_forward.1} parent=11 // pred_check
        %p282 = pneg %p112
      $region18: #{graph_transformer_forward.1} parent=11 // pred_check_branch
        %284 = sbr.rel (%p282) target = $region20
      $region19: #{graph_transformer_forward.1} parent=11 // pred_region
        _
      $region20: #{graph_transformer_forward.1} parent=11 // pred_fallthru
        _
      // Predicated region
      $region21: #{graph_transformer_forward.1} parent=11 // pred_check
        %p285 = pneg %p133
      $region22: #{graph_transformer_forward.1} parent=11 // pred_check_branch
        %287 = sbr.rel (%p285) target = $region24
      $region23: #{graph_transformer_forward.1} parent=11 // pred_region
        _
      $region24: #{graph_transformer_forward.1} parent=11 // pred_fallthru
        _
      // Predicated region
      $region25: #{graph_transformer_forward.1} parent=11 // pred_check
        %p288 = pneg %p154
      $region26: #{graph_transformer_forward.1} parent=11 // pred_check_branch
        %290 = sbr.rel (%p288) target = $region28
      $region27: #{graph_transformer_forward.1} parent=11 // pred_region
        _
      $region28: #{graph_transformer_forward.1} parent=11 // pred_fallthru
        _
      // Predicated region
      $region29: #{graph_transformer_forward.1} parent=11 // pred_check
        %p291 = pneg %p175
      $region30: #{graph_transformer_forward.1} parent=11 // pred_check_branch
        %293 = sbr.rel (%p291) target = $region32
      $region31: #{graph_transformer_forward.1} parent=11 // pred_region
        _
      $region32: #{graph_transformer_forward.1} parent=11 // pred_fallthru
        _
      // Predicated region
      $region33: #{graph_transformer_forward.1} parent=11 // pred_check
        %p294 = pneg %p196
      $region34: #{graph_transformer_forward.1} parent=11 // pred_check_branch
        %296 = sbr.rel (%p294) target = $region36
      $region35: #{graph_transformer_forward.1} parent=11 // pred_region
        _
      $region36: #{graph_transformer_forward.1} parent=11 // pred_fallthru
        _
      // Predicated region
      $region37: #{graph_transformer_forward.1} parent=11 // pred_check
        %p297 = pneg %p217
      $region38: #{graph_transformer_forward.1} parent=11 // pred_check_branch
        %299 = sbr.rel (%p297) target = $region40
      $region39: #{graph_transformer_forward.1} parent=11 // pred_region
        _
      $region40: #{graph_transformer_forward.1} parent=11 // pred_fallthru
        _
      // Predicated region
      $region41: #{graph_transformer_forward.1} parent=11 // pred_check
        %p300 = pneg %p238
      $region42: #{graph_transformer_forward.1} parent=11 // pred_check_branch
        %302 = sbr.rel (%p300) target = $region44
      $region43: #{graph_transformer_forward.1} parent=11 // pred_region
        _
      $region44: #{graph_transformer_forward.1} parent=11 // pred_fallthru
        _
    $region12: #{graph_transformer_forward.1} parent=5 // pred_fallthru
      _
    %p303 = scmp.lt.s32.totalorder %s18, 2
    // Predicated region
    $region45: #{graph_transformer_forward.1} parent=5 // pred_check
      %p304 = pneg %p303
    $region46: #{graph_transformer_forward.1} parent=5 // pred_check_branch
      %306 = sbr.rel (%p304) target = $region48
    $region47: #{graph_transformer_forward.1} parent=5 // pred_region
      // Predicated region
      $region49: #{graph_transformer_forward.1} parent=47 // pred_check
        %p307 = pneg %p38
      $region50: #{graph_transformer_forward.1} parent=47 // pred_check_branch
        %309 = sbr.rel (%p307) target = $region52
      $region51: #{graph_transformer_forward.1} parent=47 // pred_region
        %p310 = scmp.lt.s32.totalorder %s18, 1
        %s311 = scalar_select %p310, %s18, 1
        %s312 = smul.addr %s311, 8
        %s313 = scalar_lea.vmem %s0, %s312
      $region52: #{graph_transformer_forward.1} parent=47 // pred_fallthru
        _
      // Predicated region
      $region53: #{graph_transformer_forward.1} parent=47 // pred_check
        %p314 = pneg %p64
      $region54: #{graph_transformer_forward.1} parent=47 // pred_check_branch
        %316 = sbr.rel (%p314) target = $region56
      $region55: #{graph_transformer_forward.1} parent=47 // pred_region
        %p317 = scmp.lt.s32.totalorder %s18, 1
        %s318 = scalar_select %p317, %s18, 1
        %s319 = smul.addr %s318, 8
        %s320 = scalar_lea.vmem %s1, %s319
      $region56: #{graph_transformer_forward.1} parent=47 // pred_fallthru
        _
    $region48: #{graph_transformer_forward.1} parent=5 // pred_fallthru
      _
    %p321 = scmp.le.s32.totalorder 1, %s18
    %p322 = scmp.lt.s32.totalorder %s18, 3
    %p323 = pnand %p321, %p322
    %p324 = pneg %p323
    // Predicated region
    $region57: #{graph_transformer_forward.1} parent=5 // pred_check
      _
    $region58: #{graph_transformer_forward.1} parent=5 // pred_check_branch
      %326 = sbr.rel (%p323) target = $region60
    $region59: #{graph_transformer_forward.1} parent=5 // pred_region
      %s327 = ssub.s32 %s18, 1
      %p328 = scmp.lt.s32.totalorder %s23, 1
      %s329 = scalar_select %p328, %s23, 1
      %s330 = smul.addr %s329, 8
      %s331 = scalar_lea.vmem %s0, %s330
      %p332 = pneg %p44
      %p333 = pneg %p41
      %p334 = scmp.lt.s32.totalorder %s23, 1
      %s335 = scalar_select %p334, %s23, 1
      %s336 = smul.addr %s335, 8
      %s337 = scalar_lea.vmem %s1, %s336
      %p338 = pneg %p70
      %p339 = pneg %p67
      %p340 = pneg %p91
      %p341 = pneg %p88
      %p342 = pneg %p112
      %p343 = pneg %p109
      %p344 = pneg %p133
      %p345 = pneg %p130
      %p346 = pneg %p154
      %p347 = pneg %p151
      %p348 = pneg %p175
      %p349 = pneg %p172
      %p350 = pneg %p196
      %p351 = pneg %p193
      %p352 = pneg %p217
      %p353 = pneg %p214
      %p354 = pneg %p238
      %p355 = pneg %p235
      %p356 = pneg %p264
      %p357 = pneg %p261
      %p358 = scmp.lt.s32.totalorder %s23, 1
      %s359 = scalar_select %p358, %s23, 1
      %s360 = scalar_lea.vmem %s10, %s359
      %p361 = scmp.lt.s32.totalorder %s23, 1
      %s362 = scalar_select %p361, %s23, 1
      %s363 = smul.addr %s362, 8
      %s364 = scalar_lea.vmem %s0, %s363
      %p365 = scmp.lt.s32.totalorder %s23, 1
      %s366 = scalar_select %p365, %s23, 1
      %s367 = smul.addr %s366, 8
      %s368 = scalar_lea.vmem %s1, %s367
      %p369 = scmp.lt.s32.totalorder %s23, 1
      %s370 = scalar_select %p369, %s23, 1
      %s371 = scalar_lea.vmem %s10, %s370
      %v373 = vld [vmem:[%s364] sm:$0xff]
      %v374 = vlaneseq
      %v375 = vand.u32 %v374, 127
      %376 = vset.pattern.permute.xlu0 0
      %377 = vperm.xlu0 %376, %v373
      %v378 = vpop.permute.xlu0 %377
      %vm379 = vcmp.eq.s32.totalorder %v378, %v375
      %v380 = vsel %vm379, 1, 0
      %v381 = vcvt.s32.f32 %v380
      %vm382 = vcmask 261120
      %v383 = vsel %vm382, %v381, 0.0
      %v384 = vrot.slane %v383, 4
      %v385 = vadd.f32 %v383, %v384
      %v386 = vrot.slane %v385, 2
      %v387 = vadd.f32 %v385, %v386
      %v388 = vrot.slane %v387, 1
      %v389 = vadd.f32 %v387, %v388
      %v390 = vld [vmem:[%s368] sm:$0xff]
      %vm391 = vcmask 64512
      %v392 = vsel %vm391, %v390, 0.0
      %v393 = vrot.slane %v392, 4
      %v394 = vadd.f32 %v392, %v393
      %v395 = vrot.slane %v394, 2
      %v396 = vadd.f32 %v394, %v395
      %v397 = vrot.slane %v396, 1
      %v398 = vadd.f32 %v396, %v397
      %400 = vrot.lane.b32.xlu0 %v398, 32
      %v401 = vpop.permute.xlu0 %400
      %v403 = vsel %vm382, %v389, %v401
      %v404 = vpack.c.bf16 %v403, %v403
      %v405 = vld [vmem:[%s2] sm:$0xf]
      %v406 = vld [vmem:[%s2 + $0x4] sm:$0xf]
      %v407 = vld [vmem:[%s2 + $0x8] sm:$0xf]
      %v408 = vld [vmem:[%s2 + $0xc] sm:$0xf]
      %v409 = vld [vmem:[%s2 + $0x10] sm:$0xf]
      %v415 = vunpack.c.l.b16 %v405
      %v416 = vunpack.c.l.b16 %v406
      %v417 = vunpack.c.l.b16 %v407
      %v418 = vunpack.c.l.b16 %v408
      %v419 = vunpack.c.l.b16 %v409
      %v420 = vpack.c.b16 %v416, %v415
      %v421 = vpack.c.b16 %v418, %v417
      %v422 = vpack.c.b16 %v419, %v419
      %vm425 = vcmask 326656
      %v427 = vsel %vm425, %v404, 0
      %vm429 = vcmask 1043456
      %v431 = vsel %vm429, %v422, 0
      %433 = vmatpush.bf16.msra.mxu0 0
      %434 = vmatpush.bf16.msra.mxu0 0
      %435 = vmatpush.bf16.msra.mxu0 0
      %436 = vmatpush.bf16.msra.mxu0 0
      %437 = vmatpush.bf16.msra.mxu0 0
      %438 = vmatpush.bf16.msra.mxu0 %v431
      %439 = vmatpush.bf16.msra.mxu0 %v421
      %440 = vmatpush.bf16.msra.mxu0 %v420
      %441 = vmatmul.bf16.gmra.mxu0 %v427
      %v442 = vpop.f32.mrf.mxu0
      %v443 = vadd.f32 0.0, %v442
      %v444 = vpop.f32.mrf.mxu0
      %445 = vdwg.mxu0
      %v446 = vmul.f32 %v443, 0.125
      %v447 = vld [vmem:[%s3] sm:$0x1]
      %v448 = vadd.f32 %v446, %v447
      %v449 = vld [vmem:[%s4] sm:$0xff]
      %v450 = vld [vmem:[%s4 + $0x8] sm:$0xff]
      %v451 = vld [vmem:[%s4 + $0x10] sm:$0xff]
      %v452 = vld [vmem:[%s4 + $0x18] sm:$0xff]
      %v453 = vld [vmem:[%s5] sm:$0x1]
      %v455 = vsel %vm382, %v448, 0
      %457 = vmatpush.msra.mxu0 0.0
      %458 = vmatpush.msra.mxu0 0.0
      %459 = vmatpush.msra.mxu0 0.0
      %460 = vmatpush.msra.mxu0 0.0
      %461 = vmatpush.msra.mxu0 0.0
      %462 = vmatpush.msra.mxu0 0.0
      %463 = vmatpush.msra.mxu0 0.0
      %464 = vmatpush.msra.mxu0 0.0
      %465 = vmatpush.msra.mxu0 0.0
      %466 = vmatpush.msra.mxu0 0.0
      %467 = vmatpush.msra.mxu0 0.0
      %468 = vmatpush.msra.mxu0 0.0
      %469 = vmatpush.msra.mxu0 %v452
      %470 = vmatpush.msra.mxu0 %v451
      %471 = vmatpush.msra.mxu0 %v450
      %472 = vmatpush.msra.mxu0 %v449
      %473 = vmatmul.f32.gmra.mxu0 %v455
      %v474 = vpop.f32.mrf.mxu0
      %v475 = vadd.f32 %v453, %v474
      %476 = vdwg.mxu0
      %v477 = vmax.f32 %v475, 0.0
      %v478 = vld [vmem:[%s6] sm:$0xff]
      %v479 = vld [vmem:[%s6 + $0x8] sm:$0xff]
      %v480 = vld [vmem:[%s7] sm:$0x1]
      %vm481 = vcmask 130048
      %v483 = vsel %vm481, %v477, 0
      %485 = vmatpush.msra.mxu0 0.0
      %486 = vmatpush.msra.mxu0 0.0
      %487 = vmatpush.msra.mxu0 0.0
      %488 = vmatpush.msra.mxu0 0.0
      %489 = vmatpush.msra.mxu0 0.0
      %490 = vmatpush.msra.mxu0 0.0
      %491 = vmatpush.msra.mxu0 0.0
      %492 = vmatpush.msra.mxu0 0.0
      %493 = vmatpush.msra.mxu0 0.0
      %494 = vmatpush.msra.mxu0 0.0
      %495 = vmatpush.msra.mxu0 0.0
      %496 = vmatpush.msra.mxu0 0.0
      %497 = vmatpush.msra.mxu0 0.0
      %498 = vmatpush.msra.mxu0 0.0
      %499 = vmatpush.msra.mxu0 %v479
      %500 = vmatpush.msra.mxu0 %v478
      %501 = vmatmul.f32.gmra.mxu0 %v483
      %v502 = vpop.f32.mrf.mxu0
      %v503 = vadd.f32 %v480, %v502
      %504 = vdwg.mxu0
      %v505 = vmax.f32 %v503, 0.0
      %v506 = vld [vmem:[%s8] sm:$0xff]
      %v507 = vld [vmem:[#allocation2] sm:$0x1]
      %v509 = vsel %vm391, %v505, 0
      %511 = vmatpush.msra.mxu0 0.0
      %512 = vmatpush.msra.mxu0 0.0
      %513 = vmatpush.msra.mxu0 0.0
      %514 = vmatpush.msra.mxu0 0.0
      %515 = vmatpush.msra.mxu0 0.0
      %516 = vmatpush.msra.mxu0 0.0
      %517 = vmatpush.msra.mxu0 0.0
      %518 = vmatpush.msra.mxu0 0.0
      %519 = vmatpush.msra.mxu0 0.0
      %520 = vmatpush.msra.mxu0 0.0
      %521 = vmatpush.msra.mxu0 0.0
      %522 = vmatpush.msra.mxu0 0.0
      %523 = vmatpush.msra.mxu0 0.0
      %524 = vmatpush.msra.mxu0 0.0
      %525 = vmatpush.msra.mxu0 0.0
      %526 = vmatpush.msra.mxu0 %v506
      %527 = vmatmul.f32.gmra.mxu0 %v509
      %v528 = vpop.f32.mrf.mxu0
      %v529 = vadd.f32 %v507, %v528
      %530 = vdwg.mxu0
      %531 = vxpose.xlu0.b32.start [1/16] %v529, 128
      %532 = vxpose.xlu0.b32.cont [2/16] 0.0, 128
      %533 = vxpose.xlu0.b32.cont [3/16] 0.0, 128
      %534 = vxpose.xlu0.b32.cont [4/16] 0.0, 128
      %535 = vxpose.xlu0.b32.cont [5/16] 0.0, 128
      %536 = vxpose.xlu0.b32.cont [6/16] 0.0, 128
      %537 = vxpose.xlu0.b32.cont [7/16] 0.0, 128
      %538 = vxpose.xlu0.b32.cont [8/16] 0.0, 128
      %539 = vxpose.xlu0.b32.cont [9/16] 0.0, 128
      %540 = vxpose.xlu0.b32.cont [10/16] 0.0, 128
      %541 = vxpose.xlu0.b32.cont [11/16] 0.0, 128
      %542 = vxpose.xlu0.b32.cont [12/16] 0.0, 128
      %543 = vxpose.xlu0.b32.cont [13/16] 0.0, 128
      %544 = vxpose.xlu0.b32.cont [14/16] 0.0, 128
      %545 = vxpose.xlu0.b32.cont [15/16] 0.0, 128
      %546 = vxpose.xlu0.b32.end [16/16] 0.0, 128
      %v547 = vpop.trf.xlu0
      %v548 = vpop.trf.xlu0
      %v549 = vpop.trf.xlu0
      %v550 = vpop.trf.xlu0
      %v551 = vpop.trf.xlu0
      %v552 = vpop.trf.xlu0
      %v553 = vpop.trf.xlu0
      %v554 = vpop.trf.xlu0
      %v555 = vpop.trf.xlu0
      %v556 = vpop.trf.xlu0
      %v557 = vpop.trf.xlu0
      %v558 = vpop.trf.xlu0
      %v559 = vpop.trf.xlu0
      %v560 = vpop.trf.xlu0
      %v561 = vpop.trf.xlu0
      %v562 = vpop.trf.xlu0
      %vm563 = vcmask 0
      %564 = vst.msk [vmem:[%s371] sm:$0x1] %vm563, %v547
      %p565 = scmp.lt.s32.totalorder %s23, 1
      %s566 = scalar_select %p565, %s23, 1
      %s567 = scalar_lea.vmem %s10, %s566
      // Predicated region
      $region61: #{graph_transformer_forward.1} parent=59 // pred_check
        %p568 = pneg %p261
      $region62: #{graph_transformer_forward.1} parent=59 // pred_check_branch
        %570 = sbr.rel (%p568) target = $region64
      $region63: #{graph_transformer_forward.1} parent=59 // pred_region
        _
      $region64: #{graph_transformer_forward.1} parent=59 // pred_fallthru
        _
    $region60: #{graph_transformer_forward.1} parent=5 // pred_fallthru
      _
    %p571 = scmp.le.s32.totalorder 2, %s18
    // Predicated region
    $region65: #{graph_transformer_forward.1} parent=5 // pred_check
      %p572 = pneg %p571
    $region66: #{graph_transformer_forward.1} parent=5 // pred_check_branch
      %574 = sbr.rel (%p572) target = $region68
    $region67: #{graph_transformer_forward.1} parent=5 // pred_region
      %s575 = ssub.s32 %s18, 2
      // Predicated region
      $region69: #{graph_transformer_forward.1} parent=67 // pred_check
        %p576 = pneg %p267
      $region70: #{graph_transformer_forward.1} parent=67 // pred_check_branch
        %578 = sbr.rel (%p576) target = $region72
      $region71: #{graph_transformer_forward.1} parent=67 // pred_region
        %p579 = scmp.lt.s32.totalorder %s24, 1
        %s580 = scalar_select %p579, %s24, 1
        %s581 = scalar_lea.vmem %s10, %s580
      $region72: #{graph_transformer_forward.1} parent=67 // pred_fallthru
        _
    $region68: #{graph_transformer_forward.1} parent=5 // pred_fallthru
      _
  $region6: #{graph_transformer_forward.1} parent=0 // loop_footer
    %s22 = sadd.s32 1, %s18
  $region7: #{graph_transformer_forward.1} parent=0 // loop_footer_branch
    %17 = sbr.rel target = $region3
  $region8: #{graph_transformer_forward.1} parent=0 // loop_exit
    _

</llo_original>
